<compile_context>
chip_gen: v6e
topology: v6e:2x2x1
jax: 0.10.0
libtpu: 0.0.40
codegen_flags: <defaults>
</compile_context>

<pallas_src>
import jax
import jax.numpy as jnp
from jax.experimental import pallas as pl
from jax.experimental.pallas import tpu as pltpu


def horizontal_conv_kernel(x_ref, w_ref, scale_ref, shift_ref, o_ref, r_ref):
    # x_ref:     (Nb, Cin, F, T)    input block (f32 or bf16)
    # w_ref:     (Cout, K*Cin)      bf16 weight, columns ordered (k, ci)
    # scale_ref: (Cout, 1)          f32: gamma / sqrt(var + eps)
    # shift_ref: (Cout, 1)          f32: beta + scale * (conv_bias - running_mean)
    # o_ref:     (Cout, Nb*Tpad)    output slab, batch folded into the lane axis
    # r_ref:     (K*Cin, Nb*Tpad)   bf16 scratch: im2col matrix
    Nb, Cin, F, T = x_ref.shape
    Cout, KCin = w_ref.shape
    K = KCin // Cin
    P = K // 2
    Tout = T                        # odd K with padding K//2 -> 'same' output length
    Tpad = r_ref.shape[1] // Nb     # 128-aligned per-batch lane stride

    # ---- AvgPool2d((F,1)) + squeeze(2): mean over freq, accumulated in f32 in
    # 8-sublane chunks so the full (Nb, Cin, F, T) block never sits in vregs.
    FC = 8
    nfull = F // FC
    acc = jnp.zeros((Nb, Cin, T), jnp.float32)

    def fmean_body(i, a):
        f0 = pl.multiple_of(i * FC, FC)
        return a + jnp.sum(x_ref[:, :, pl.ds(f0, FC), :].astype(jnp.float32), axis=2)

    if nfull > 0:
        acc = jax.lax.fori_loop(0, nfull, fmean_body, acc, unroll=True)
    if F % FC:
        f0 = nfull * FC
        acc = acc + jnp.sum(x_ref[:, :, f0:F, :].astype(jnp.float32), axis=2)
    pooled = (acc * (1.0 / F)).astype(jnp.bfloat16)          # (Nb, Cin, T), bf16 for MXU

    # ---- im2col with implicit 'same' time zero-padding:
    #   r[k*Cin + ci, b*Tpad + t] = pooled[b, ci, t + k - P]   (0 outside [0, T))
    # Each (k, b) write is a full-width (Cin, Tout) store at a 128-aligned lane
    # offset (b*Tpad).  Scratch columns [Tout, Tpad) per batch are never written:
    # they only feed output columns the wrapper slices off, so stale data there is
    # harmless (matmul columns and the elementwise epilogue are independent).
    zpad = jnp.zeros((Cin, P), jnp.bfloat16)
    for b in range(Nb):
        pb = pooled[b]                                                   # (Cin, T)
        pbp = jnp.concatenate([zpad, pb, zpad], axis=1) if P > 0 else pb  # (Cin, T+2P)
        for k in range(K):
            r_ref[k * Cin:(k + 1) * Cin,
                  b * Tpad: b * Tpad + Tout] = pbp[:, k: k + Tout]

    # ---- Single fused MXU matmul: contraction K*Cin, lane dim Nb*Tpad (lane-dense).
    acc_mm = jnp.dot(w_ref[...], r_ref[...],
                     preferred_element_type=jnp.float32)     # (Cout, Nb*Tpad), f32

    # ---- Folded conv-bias + BatchNorm affine (eval mode) + ReLU, in f32.
    y = acc_mm * scale_ref[...] + shift_ref[...]
    o_ref[...] = jnp.maximum(y, 0.0).astype(o_ref.dtype)


def _round_up(x, m):
    return ((x + m - 1) // m) * m


def _vmem_caps():
    """Generation-aware (Nb-picking budget, vmem_limit_bytes)."""
    cap = 64 << 20                           # conservative default = v7x per-core VMEM
    try:
        info = pltpu.get_tpu_info()
        c = getattr(info, "vmem_capacity_bytes", None)
        if c:
            cap = int(c)
    except Exception:
        pass
    budget = cap // 2                        # v5e/v6e: ~64 MiB, v7x: ~32 MiB
    limit = min((cap * 3) // 4, 100 << 20)   # v5e/v6e: ~96 MiB, v7x: 48 MiB
    return budget, limit


def _pick_nb(N, Cin, F, T, Cout, K, tpad, x_itemsize, budget):
    """Largest batch block fitting the VMEM budget, preferring >= 2 grid steps so the
    'parallel' batch axis can feed both v7x TensorCores."""
    per_b = (2 * Cin * F * T * x_itemsize    # x block, double-buffered
             + 2 * Cout * tpad * 4           # output slab, double-buffered (f32)
             + K * Cin * tpad * 2)           # bf16 im2col scratch (single copy)
    nb = 1                                   # Nb=1 always valid; budget is advisory
    for cand in range(1, N + 1):
        if N % cand == 0 and cand * per_b <= budget:
            nb = cand
    if N >= 2 and N // nb < 2:
        for cand in range(nb - 1, 0, -1):
            if N % cand == 0 and N // cand >= 2:
                nb = cand
                break
    # TODO(synk): support non-divisor Nb via a remainder grid step for large prime N.
    return nb


def horizontal_conv(x, w, b, gamma, beta, run_mean, run_var, eps=1e-5):
    """x: (N, Cin, F, T) float32 or bfloat16.  Returns (N, Cout, T) in x.dtype."""
    N, Cin, F, T = x.shape
    Cout, Cin_w, K = w.shape
    assert Cin_w == Cin
    assert K % 2 == 1, "filter_length must be odd to match PyTorch 'same' output length"
    Tout = T
    Tpad = _round_up(Tout, 128)              # lane-dense, 128-aligned per-batch stride

    budget, vmem_limit = _vmem_caps()
    Nb = _pick_nb(N, Cin, F, T, Cout, K, Tpad, x.dtype.itemsize, budget)
    G = N // Nb

    # Fold conv bias + BatchNorm (eval mode) into per-channel scale/shift.
    inv_std = jax.lax.rsqrt(run_var.astype(jnp.float32) + eps)
    gamma_f = gamma.astype(jnp.float32)
    scale = (gamma_f * inv_std).reshape(Cout, 1)
    shift = (beta.astype(jnp.float32)
             + gamma_f * inv_std * (b.astype(jnp.float32)
                                    - run_mean.astype(jnp.float32))).reshape(Cout, 1)

    # Weight as (Cout, K*Cin) with column order (k, ci); bf16 for the MXU.
    w2 = jnp.transpose(w, (0, 2, 1)).reshape(Cout, K * Cin).astype(jnp.bfloat16)

    # TODO(synk): for very long T, add a second 'parallel' grid axis over time with a
    # (K-1) halo (manual pltpu.make_async_copy from a memory_space=pl.ANY x ref) so
    # per-step blocks stay bounded under v7x's 64 MiB VMEM even when N <= 2.
    out = pl.pallas_call(
        horizontal_conv_kernel,
        out_shape=jax.ShapeDtypeStruct((G, Cout, Nb * Tpad), x.dtype),
        grid_spec=pltpu.PrefetchScalarGridSpec(
            num_scalar_prefetch=0,
            grid=(G,),
            in_specs=[
                pl.BlockSpec((Nb, Cin, F, T), lambda g: (g, 0, 0, 0)),
                pl.BlockSpec((Cout, K * Cin), lambda g: (0, 0)),
                pl.BlockSpec((Cout, 1), lambda g: (0, 0)),
                pl.BlockSpec((Cout, 1), lambda g: (0, 0)),
            ],
            out_specs=pl.BlockSpec((None, Cout, Nb * Tpad), lambda g: (g, 0, 0)),
            scratch_shapes=[pltpu.VMEM((K * Cin, Nb * Tpad), jnp.bfloat16)],
        ),
        compiler_params=pltpu.CompilerParams(
            dimension_semantics=("parallel",),
            vmem_limit_bytes=vmem_limit,
        ),
    )(x, w2, scale, shift)

    # Un-fold batch from the lane axis and drop the 128-alignment padding:
    # (G, Cout, Nb*Tpad) -> (N, Cout, Tout).
    out = out.reshape(G, Cout, Nb, Tpad)[:, :, :, :Tout]
    out = out.transpose(0, 2, 1, 3).reshape(N, Cout, Tout)
    return out


if __name__ == "__main__":
    key = jax.random.PRNGKey(0)
    N, Cin, F, T = 2, 4, 16, 16
    Cout, K = 8, 5
    eps = 1e-5

    keys = jax.random.split(key, 7)
    x = jax.random.normal(keys[0], (N, Cin, F, T), jnp.float32)

    # Deterministic parameter init (Conv1d default-style uniform bounds).
    bound = 1.0 / ((Cin * K) ** 0.5)
    w = jax.random.uniform(keys[1], (Cout, Cin, K), jnp.float32, -bound, bound)
    b = jax.random.uniform(keys[2], (Cout,), jnp.float32, -bound, bound)
    gamma = jax.random.uniform(keys[3], (Cout,), jnp.float32, 0.5, 1.5)
    beta = jax.random.normal(keys[4], (Cout,), jnp.float32) * 0.1
    run_mean = jax.random.normal(keys[5], (Cout,), jnp.float32) * 0.1
    run_var = jax.random.uniform(keys[6], (Cout,), jnp.float32, 0.5, 1.5)

    out = jax.block_until_ready(
        horizontal_conv(x, w, b, gamma, beta, run_mean, run_var, eps)
    )

    # Pure-JAX reference (AvgPool over freq -> Conv1d -> BN(eval) -> ReLU).
    def conv_bn_relu(pooled_in, w_in):
        conv = jax.lax.conv_general_dilated(
            pooled_in, w_in, window_strides=(1,), padding=[(K // 2, K // 2)],
            dimension_numbers=("NCH", "OIH", "NCH"))
        conv = conv + b[None, :, None]
        bn = (gamma[None, :, None] * (conv - run_mean[None, :, None])
              * jax.lax.rsqrt(run_var[None, :, None] + eps) + beta[None, :, None])
        return jnp.maximum(bn, 0.0)

    pooled_ref = jnp.mean(x, axis=2)                               # (N, Cin, T)
    ref = conv_bn_relu(pooled_ref, w)                              # exact f32 reference
    # Reference with the same bf16 rounding applied to the MXU operands (tight check).
    ref_bf16 = conv_bn_relu(pooled_ref.astype(jnp.bfloat16).astype(jnp.float32),
                            w.astype(jnp.bfloat16).astype(jnp.float32))

    assert out.shape == ref.shape == (N, Cout, T)
    assert jnp.allclose(out, ref_bf16, atol=5e-3, rtol=5e-3), float(
        jnp.max(jnp.abs(out - ref_bf16)))
    # Looser bound vs. the exact f32 reference accounts for bf16 MXU operands.
    assert jnp.allclose(out, ref, atol=5e-2, rtol=5e-2), float(
        jnp.max(jnp.abs(out - ref)))
    print("KERNEL_OK")
</pallas_src>

<mosaic_0001>
module attributes {stable_mosaic.version = 11 : i64} {
  func.func @horizontal_conv_kernel(%arg0: i32, %arg1: memref<1x4x16x16xf32, #tpu.memory_space<vmem>>, %arg2: memref<8x20xbf16, #tpu.memory_space<vmem>>, %arg3: memref<8x1xf32, #tpu.memory_space<vmem>>, %arg4: memref<8x1xf32, #tpu.memory_space<vmem>>, %arg5: memref<1x8x128xf32, #tpu.memory_space<vmem>>, %arg6: memref<20x128xbf16, #tpu.memory_space<vmem>>) attributes {dimension_semantics = [#tpu.dimension_semantics<parallel>], iteration_bounds = array<i64: 2>, scalar_prefetch = 0 : i64, scratch_operands = 1 : i64, tpu.core_type = #tpu.core_type<tc>, window_params = [{transform_indices = @transform_0, window_bounds = array<i64: 1, 4, 16, 16>}, {pipeline_mode = #tpu.pipeline_mode<synchronous>, transform_indices = @transform_1, window_bounds = array<i64: 8, 20>}, {pipeline_mode = #tpu.pipeline_mode<synchronous>, transform_indices = @transform_2, window_bounds = array<i64: 8, 1>}, {pipeline_mode = #tpu.pipeline_mode<synchronous>, transform_indices = @transform_3, window_bounds = array<i64: 8, 1>}, {transform_indices = @transform_4, window_bounds = array<i64: 1, 8, 128>}]} {
    %cst = arith.constant 0.000000e+00 : f32
    %0 = vector.broadcast %cst : f32 to vector<1x4x16xf32>
    %c0_i32 = arith.constant 0 : i32
    %c8_i32 = arith.constant 8 : i32
    %1 = arith.muli %c0_i32, %c8_i32 : i32
    %2 = tpu.assume_multiple %1, 8 : i32
    %c0 = arith.constant 0 : index
    %c0_0 = arith.constant 0 : index
    %3 = arith.index_cast %2 : i32 to index
    %c0_1 = arith.constant 0 : index
    %4 = vector.load %arg1[%c0, %c0_0, %3, %c0_1] : memref<1x4x16x16xf32, #tpu.memory_space<vmem>>, vector<1x4x8x16xf32>
    %cst_2 = arith.constant dense<0.000000e+00> : vector<1x4x16xf32>
    %5 = vector.multi_reduction <add>, %4, %cst_2 [2] : vector<1x4x8x16xf32> to vector<1x4x16xf32>
    %6 = arith.addf %0, %5 : vector<1x4x16xf32>
    %c1_i32 = arith.constant 1 : i32
    %c8_i32_3 = arith.constant 8 : i32
    %7 = arith.muli %c1_i32, %c8_i32_3 : i32
    %8 = tpu.assume_multiple %7, 8 : i32
    %c0_4 = arith.constant 0 : index
    %c0_5 = arith.constant 0 : index
    %9 = arith.index_cast %8 : i32 to index
    %c0_6 = arith.constant 0 : index
    %10 = vector.load %arg1[%c0_4, %c0_5, %9, %c0_6] : memref<1x4x16x16xf32, #tpu.memory_space<vmem>>, vector<1x4x8x16xf32>
    %cst_7 = arith.constant dense<0.000000e+00> : vector<1x4x16xf32>
    %11 = vector.multi_reduction <add>, %10, %cst_7 [2] : vector<1x4x8x16xf32> to vector<1x4x16xf32>
    %12 = arith.addf %6, %11 : vector<1x4x16xf32>
    %c2_i32 = arith.constant 2 : i32
    %cst_8 = arith.constant 6.250000e-02 : f32
    %13 = vector.broadcast %cst_8 : f32 to vector<1x4x16xf32>
    %14 = arith.mulf %12, %13 : vector<1x4x16xf32>
    %15 = arith.truncf %14 : vector<1x4x16xf32> to vector<1x4x16xbf16>
    %cst_9 = arith.constant 0.000000e+00 : bf16
    %16 = vector.broadcast %cst_9 : bf16 to vector<4x2xbf16>
    %17 = vector.shape_cast %15 : vector<1x4x16xbf16> to vector<4x16xbf16>
    %18 = tpu.concatenate %16, %17, %16 in 1 : vector<4x2xbf16>, vector<4x16xbf16>, vector<4x2xbf16> -> vector<4x20xbf16>
    %19 = vector.extract_strided_slice %18 {offsets = [0, 0], sizes = [4, 16], strides = [1, 1]} : vector<4x20xbf16> to vector<4x16xbf16>
    %c0_10 = arith.constant 0 : index
    %c0_11 = arith.constant 0 : index
    %20 = vector.load %arg6[%c0_10, %c0_11] : memref<20x128xbf16, #tpu.memory_space<vmem>>, vector<4x16xbf16>
    tpu.vector_store %arg6[%c0_10, %c0_11], %19 {strides = array<i32>} : memref<20x128xbf16, #tpu.memory_space<vmem>>, vector<4x16xbf16>,
    %21 = vector.extract_strided_slice %18 {offsets = [0, 1], sizes = [4, 16], strides = [1, 1]} : vector<4x20xbf16> to vector<4x16xbf16>
    %c4 = arith.constant 4 : index
    %c0_12 = arith.constant 0 : index
    %22 = vector.load %arg6[%c4, %c0_12] : memref<20x128xbf16, #tpu.memory_space<vmem>>, vector<4x16xbf16>
    tpu.vector_store %arg6[%c4, %c0_12], %21 {strides = array<i32>} : memref<20x128xbf16, #tpu.memory_space<vmem>>, vector<4x16xbf16>,
    %23 = vector.extract_strided_slice %18 {offsets = [0, 2], sizes = [4, 16], strides = [1, 1]} : vector<4x20xbf16> to vector<4x16xbf16>
    %c8 = arith.constant 8 : index
    %c0_13 = arith.constant 0 : index
    %24 = vector.load %arg6[%c8, %c0_13] : memref<20x128xbf16, #tpu.memory_space<vmem>>, vector<4x16xbf16>
    tpu.vector_store %arg6[%c8, %c0_13], %23 {strides = array<i32>} : memref<20x128xbf16, #tpu.memory_space<vmem>>, vector<4x16xbf16>,
    %25 = vector.extract_strided_slice %18 {offsets = [0, 3], sizes = [4, 16], strides = [1, 1]} : vector<4x20xbf16> to vector<4x16xbf16>
    %c12 = arith.constant 12 : index
    %c0_14 = arith.constant 0 : index
    %26 = vector.load %arg6[%c12, %c0_14] : memref<20x128xbf16, #tpu.memory_space<vmem>>, vector<4x16xbf16>
    tpu.vector_store %arg6[%c12, %c0_14], %25 {strides = array<i32>} : memref<20x128xbf16, #tpu.memory_space<vmem>>, vector<4x16xbf16>,
    %27 = vector.extract_strided_slice %18 {offsets = [0, 4], sizes = [4, 16], strides = [1, 1]} : vector<4x20xbf16> to vector<4x16xbf16>
    %c16 = arith.constant 16 : index
    %c0_15 = arith.constant 0 : index
    %28 = vector.load %arg6[%c16, %c0_15] : memref<20x128xbf16, #tpu.memory_space<vmem>>, vector<4x16xbf16>
    tpu.vector_store %arg6[%c16, %c0_15], %27 {strides = array<i32>} : memref<20x128xbf16, #tpu.memory_space<vmem>>, vector<4x16xbf16>,
    %c0_16 = arith.constant 0 : index
    %c0_17 = arith.constant 0 : index
    %29 = vector.load %arg2[%c0_16, %c0_17] : memref<8x20xbf16, #tpu.memory_space<vmem>>, vector<8x20xbf16>
    %c0_18 = arith.constant 0 : index
    %c0_19 = arith.constant 0 : index
    %30 = vector.load %arg6[%c0_18, %c0_19] : memref<20x128xbf16, #tpu.memory_space<vmem>>, vector<20x128xbf16>
    %cst_20 = arith.constant dense<0.000000e+00> : vector<8x128xf32>
    %31 = tpu.matmul %29, %30, %cst_20 {dimension_numbers = #tpu.dot_dimension_numbers<[1], [0], [0], [1], [0, 0, 1, 1], [], []>} : vector<8x20xbf16>, vector<20x128xbf16>, vector<8x128xf32> -> vector<8x128xf32>
    %c0_21 = arith.constant 0 : index
    %c0_22 = arith.constant 0 : index
    %32 = vector.load %arg3[%c0_21, %c0_22] : memref<8x1xf32, #tpu.memory_space<vmem>>, vector<8x1xf32>
    %33 = vector.broadcast %32 : vector<8x1xf32> to vector<8x128xf32>
    %34 = arith.mulf %31, %33 : vector<8x128xf32>
    %c0_23 = arith.constant 0 : index
    %c0_24 = arith.constant 0 : index
    %35 = vector.load %arg4[%c0_23, %c0_24] : memref<8x1xf32, #tpu.memory_space<vmem>>, vector<8x1xf32>
    %36 = vector.broadcast %35 : vector<8x1xf32> to vector<8x128xf32>
    %37 = arith.addf %34, %36 : vector<8x128xf32>
    %cst_25 = arith.constant 0.000000e+00 : f32
    %38 = vector.broadcast %cst_25 : f32 to vector<8x128xf32>
    %39 = arith.maximumf %37, %38 : vector<8x128xf32>
    %c0_26 = arith.constant 0 : index
    %c0_27 = arith.constant 0 : index
    %c0_28 = arith.constant 0 : index
    %40 = vector.load %arg5[%c0_26, %c0_27, %c0_28] : memref<1x8x128xf32, #tpu.memory_space<vmem>>, vector<1x8x128xf32>
    %41 = vector.shape_cast %40 : vector<1x8x128xf32> to vector<8x128xf32>
    %42 = vector.shape_cast %39 : vector<8x128xf32> to vector<1x8x128xf32>
    tpu.vector_store %arg5[%c0_26, %c0_27, %c0_28], %42 {strides = array<i32>} : memref<1x8x128xf32, #tpu.memory_space<vmem>>, vector<1x8x128xf32>,
    return
  }
  func.func @transform_0(%arg0: i32) -> (i32, i32, i32, i32) {
    %c0_i32 = arith.constant 0 : i32
    %c0_i32_0 = arith.constant 0 : i32
    %c0_i32_1 = arith.constant 0 : i32
    %c0_i32_2 = arith.constant 0 : i32
    return %arg0, %c0_i32, %c0_i32_0, %c0_i32_1 : i32, i32, i32, i32
  }
  func.func @transform_1(%arg0: i32) -> (i32, i32) {
    %c0_i32 = arith.constant 0 : i32
    %c0_i32_0 = arith.constant 0 : i32
    %c0_i32_1 = arith.constant 0 : i32
    return %c0_i32, %c0_i32_0 : i32, i32
  }
  func.func @transform_2(%arg0: i32) -> (i32, i32) {
    %c0_i32 = arith.constant 0 : i32
    %c0_i32_0 = arith.constant 0 : i32
    %c0_i32_1 = arith.constant 0 : i32
    return %c0_i32, %c0_i32_0 : i32, i32
  }
  func.func @transform_3(%arg0: i32) -> (i32, i32) {
    %c0_i32 = arith.constant 0 : i32
    %c0_i32_0 = arith.constant 0 : i32
    %c0_i32_1 = arith.constant 0 : i32
    return %c0_i32, %c0_i32_0 : i32, i32
  }
  func.func @transform_4(%arg0: i32) -> (i32, i32, i32) {
    %c0_i32 = arith.constant 0 : i32
    %c0_i32_0 = arith.constant 0 : i32
    %c0_i32_1 = arith.constant 0 : i32
    return %arg0, %c0_i32, %c0_i32_0 : i32, i32, i32
  }
}

</mosaic_0001>

<llo_original>
// kernel: tpu_custom_call.1
$region0: #{tpu_custom_call.1}
  #allocation0 [shape = 'u32[]', space=smem, size = 0x4, offset = 0x4, fixed_abs, tag = 'smem constant byte address 0x4 - core index']
  #allocation1 [shape = 'u32[144,128]{1,0:T(1,128)}', space=vmem, size = 0x12000, scoped, tag = 'internal scratch']
  #allocation2 [shape = 'bf16[20,128]{1,0:T(8,128)(2,1)}', space=vmem, size = 0x1800, scoped, tag = 'scratch operand']
  %s0 = inlined_call_operand.hbm [shape: f32[2,4,16,16], index: 0, kind: input, shape index: {}]
  %s1 = inlined_call_operand.vmem [shape: bf16[8,20], index: 1, kind: input, shape index: {}]
  %s2 = inlined_call_operand.vmem [shape: f32[8,1], index: 2, kind: input, shape index: {}]
  %s3 = inlined_call_operand.vmem [shape: f32[8,1], index: 3, kind: input, shape index: {}]
  %s4 = inlined_call_operand.hbm [shape: f32[2,8,128], index: 4, kind: output, shape index: {}]
  %s5 = sld [smem:[#allocation0]]
  $region53: #{tpu_custom_call.1} parent=0
    _
  %s7 = ssub.s32 1, %s5
  %s8 = scalar_select 0, %s7, %s5
  $region1: #{tpu_custom_call.1} parent=0
    #allocation3 [shape = 'u8[65536]{0}', space=vmem, size = 0x10000, scoped, tag = 'input window, operand 0']
    #allocation4 [shape = 's32[2]{0}', space=sflag, size = 0x8, scoped, tag = 'scoped memory for tpu_custom_call.1']
    #allocation5 [shape = 's32[2]{0}', space=sflag, size = 0x8, scoped, tag = 'scoped memory for tpu_custom_call.1']
    #allocation6 [shape = 'u8[8192]{0}', space=vmem, size = 0x2000, scoped, tag = 'output window, operand 0']
    %9 = vsyncpa [#allocation4], 0
    %s10 = scalar_lea.sflag [#allocation4], 1
    %11 = vsyncpa %s10, 0
    %12 = vsyncpa [#allocation5], 0
    %s13 = scalar_lea.sflag [#allocation5], 1
    %14 = vsyncpa %s13, 0
    loop: start=0, step=1, limit=4
    $region2: #{tpu_custom_call.1} parent=1 // loop_pre_header
      _
    $region3: #{tpu_custom_call.1} parent=1 // loop_header
      %s16 = sphi 0, %s20
      %p17 = scmp.ge.s32.totalorder %s16, 4
      %s26 = sphi 0, %s28
      %s29 = sphi 0, %s26
      %s30 = sphi 0, %s29
      %s46 = sphi 0, %s30
      %s50 = sphi 0, %s50
      %s52 = sphi 0, %s50
      %s53 = sphi 0, %s52
      %s67 = sphi 0, %s53
      %s71 = sphi 0, %s71
      %s73 = sphi 0, %s71
      %s74 = sphi 0, %s73
      %s88 = sphi 0, %s74
      %s92 = sphi 0, %s92
      %s94 = sphi 0, %s92
      %s95 = sphi 0, %s94
      %s109 = sphi 0, %s95
      %s115 = sphi 0, %s117
      %s118 = sphi 0, %s115
      %s119 = sphi 0, %s118
      %s135 = sphi 0, %s119
    $region4: #{tpu_custom_call.1} parent=1 // loop_header_branch
      %19 = sbr.rel (%p17) target = $region8
    $region5: #{tpu_custom_call.1} parent=1 // loop_body
      %s21 = ssub.s32 %s16, 1
      %s22 = ssub.s32 %s16, 2
      %s23 = sadd.s32 %s16, 1
      %s24 = ssub.s32 %s16, %s23
      %p25 = scmp.eq.s32.totalorder %s24, 0
      %s27 = sadd.s32 %s26, 1
      %s28 = scalar_select %p25, %s26, %s27
      %p31 = pneg %p25
      %p32 = scmp.eq.s32.totalorder %s16, 1
      %p33 = por %p31, %p32
      %p34 = scmp.ne.s32.totalorder %s26, %s29
      %p35 = scmp.eq.s32.totalorder %s16, 0
      %p36 = por %p34, %p35
      %p37 = scmp.ne.s32.totalorder %s26, %s29
      %p38 = scmp.eq.s32.totalorder %s21, 1
      %p39 = por %p37, %p38
      %p40 = scmp.ne.s32.totalorder %s29, %s30
      %p41 = scmp.eq.s32.totalorder %s21, 0
      %p42 = por %p40, %p41
      %p43 = scmp.ne.s32.totalorder %s29, %s30
      %p44 = scmp.eq.s32.totalorder %s22, 1
      %p45 = por %p43, %p44
      %p47 = scmp.ne.s32.totalorder %s30, %s46
      %p48 = scmp.eq.s32.totalorder %s22, 0
      %p49 = por %p47, %p48
      %s51 = sadd.s32 %s50, 1
      %p54 = scmp.eq.s32.totalorder %s16, 1
      %p55 = scmp.ne.s32.totalorder %s50, %s52
      %p56 = scmp.eq.s32.totalorder %s16, 0
      %p57 = por %p55, %p56
      %p58 = scmp.ne.s32.totalorder %s50, %s52
      %p59 = scmp.eq.s32.totalorder %s21, 1
      %p60 = por %p58, %p59
      %p61 = scmp.ne.s32.totalorder %s52, %s53
      %p62 = scmp.eq.s32.totalorder %s21, 0
      %p63 = por %p61, %p62
      %p64 = scmp.ne.s32.totalorder %s52, %s53
      %p65 = scmp.eq.s32.totalorder %s22, 1
      %p66 = por %p64, %p65
      %p68 = scmp.ne.s32.totalorder %s53, %s67
      %p69 = scmp.eq.s32.totalorder %s22, 0
      %p70 = por %p68, %p69
      %s72 = sadd.s32 %s71, 1
      %p75 = scmp.eq.s32.totalorder %s16, 1
      %p76 = scmp.ne.s32.totalorder %s71, %s73
      %p77 = scmp.eq.s32.totalorder %s16, 0
      %p78 = por %p76, %p77
      %p79 = scmp.ne.s32.totalorder %s71, %s73
      %p80 = scmp.eq.s32.totalorder %s21, 1
      %p81 = por %p79, %p80
      %p82 = scmp.ne.s32.totalorder %s73, %s74
      %p83 = scmp.eq.s32.totalorder %s21, 0
      %p84 = por %p82, %p83
      %p85 = scmp.ne.s32.totalorder %s73, %s74
      %p86 = scmp.eq.s32.totalorder %s22, 1
      %p87 = por %p85, %p86
      %p89 = scmp.ne.s32.totalorder %s74, %s88
      %p90 = scmp.eq.s32.totalorder %s22, 0
      %p91 = por %p89, %p90
      %s93 = sadd.s32 %s92, 1
      %p96 = scmp.eq.s32.totalorder %s16, 1
      %p97 = scmp.ne.s32.totalorder %s92, %s94
      %p98 = scmp.eq.s32.totalorder %s16, 0
      %p99 = por %p97, %p98
      %p100 = scmp.ne.s32.totalorder %s92, %s94
      %p101 = scmp.eq.s32.totalorder %s21, 1
      %p102 = por %p100, %p101
      %p103 = scmp.ne.s32.totalorder %s94, %s95
      %p104 = scmp.eq.s32.totalorder %s21, 0
      %p105 = por %p103, %p104
      %p106 = scmp.ne.s32.totalorder %s94, %s95
      %p107 = scmp.eq.s32.totalorder %s22, 1
      %p108 = por %p106, %p107
      %p110 = scmp.ne.s32.totalorder %s95, %s109
      %p111 = scmp.eq.s32.totalorder %s22, 0
      %p112 = por %p110, %p111
      %s113 = ssub.s32 %s16, %s23
      %p114 = scmp.eq.s32.totalorder %s113, 0
      %s116 = sadd.s32 %s115, 1
      %s117 = scalar_select %p114, %s115, %s116
      %p120 = pneg %p114
      %p121 = scmp.eq.s32.totalorder %s16, 1
      %p122 = por %p120, %p121
      %p123 = scmp.ne.s32.totalorder %s115, %s118
      %p124 = scmp.eq.s32.totalorder %s16, 0
      %p125 = por %p123, %p124
      %p126 = scmp.ne.s32.totalorder %s115, %s118
      %p127 = scmp.eq.s32.totalorder %s21, 1
      %p128 = por %p126, %p127
      %p129 = scmp.ne.s32.totalorder %s118, %s119
      %p130 = scmp.eq.s32.totalorder %s21, 0
      %p131 = por %p129, %p130
      %p132 = scmp.ne.s32.totalorder %s118, %s119
      %p133 = scmp.eq.s32.totalorder %s22, 1
      %p134 = por %p132, %p133
      %p136 = scmp.ne.s32.totalorder %s119, %s135
      %p137 = scmp.eq.s32.totalorder %s22, 0
      %p138 = por %p136, %p137
      %p139 = scmp.le.s32.totalorder 1, %s16
      %p140 = scmp.lt.s32.totalorder %s16, 3
      %p141 = pnand %p139, %p140
      %p142 = pneg %p141
      // Predicated region
      $region9: #{tpu_custom_call.1} parent=5 // pred_check
        _
      $region10: #{tpu_custom_call.1} parent=5 // pred_check_branch
        %144 = sbr.rel (%p141) target = $region12
      $region11: #{tpu_custom_call.1} parent=5 // pred_region
        %s145 = ssub.s32 %s16, 1
        // Predicated region
        $region13: #{tpu_custom_call.1} parent=11 // pred_check
          %p146 = pneg %p63
        $region14: #{tpu_custom_call.1} parent=11 // pred_check_branch
          %148 = sbr.rel (%p146) target = $region16
        $region15: #{tpu_custom_call.1} parent=11 // pred_region
          _
        $region16: #{tpu_custom_call.1} parent=11 // pred_fallthru
          _
        // Predicated region
        $region17: #{tpu_custom_call.1} parent=11 // pred_check
          %p149 = pneg %p84
        $region18: #{tpu_custom_call.1} parent=11 // pred_check_branch
          %151 = sbr.rel (%p149) target = $region20
        $region19: #{tpu_custom_call.1} parent=11 // pred_region
          _
        $region20: #{tpu_custom_call.1} parent=11 // pred_fallthru
          _
        // Predicated region
        $region21: #{tpu_custom_call.1} parent=11 // pred_check
          %p152 = pneg %p105
        $region22: #{tpu_custom_call.1} parent=11 // pred_check_branch
          %154 = sbr.rel (%p152) target = $region24
        $region23: #{tpu_custom_call.1} parent=11 // pred_region
          _
        $region24: #{tpu_custom_call.1} parent=11 // pred_fallthru
          _
      $region12: #{tpu_custom_call.1} parent=5 // pred_fallthru
        _
      %p155 = scmp.lt.s32.totalorder %s16, 2
      // Predicated region
      $region25: #{tpu_custom_call.1} parent=5 // pred_check
        %p156 = pneg %p155
      $region26: #{tpu_custom_call.1} parent=5 // pred_check_branch
        %158 = sbr.rel (%p156) target = $region28
      $region27: #{tpu_custom_call.1} parent=5 // pred_region
        // Predicated region
        $region29: #{tpu_custom_call.1} parent=27 // pred_check
          %p159 = pneg %p36
        $region30: #{tpu_custom_call.1} parent=27 // pred_check_branch
          %161 = sbr.rel (%p159) target = $region32
        $region31: #{tpu_custom_call.1} parent=27 // pred_region
          %s162 = sand.u32 %s26, 1
          %s163 = scalar_lea.sflag [#allocation4], %s162
          %s164 = sand.u32 %s26, 1
          %s165 = smul.addr %s164, 64
          %s166 = scalar_lea.vmem [#allocation3], %s165
          %s168 = ssub.s32 1024, 1024
          %169 = vsyncadd %s163, %s168
          %s170 = smul.addr %s16, 8
          %s171 = smul.addr %s170, 128
          %s172 = scalar_lea.hbm %s0, %s171
          %s173 = sshll.u32 %s166, 4
          %s174 = int_to_ptr.vmem [resolvable:$true] %s173
          %179 = dma.hbm_to_vmem [thread:$0]  %s172, 1024, %s174, %s163, 128, 128, 8
        $region32: #{tpu_custom_call.1} parent=27 // pred_fallthru
          _
      $region28: #{tpu_custom_call.1} parent=5 // pred_fallthru
        _
      %p180 = scmp.le.s32.totalorder 1, %s16
      %p181 = scmp.lt.s32.totalorder %s16, 3
      %p182 = pnand %p180, %p181
      %p183 = pneg %p182
      // Predicated region
      $region33: #{tpu_custom_call.1} parent=5 // pred_check
        _
      $region34: #{tpu_custom_call.1} parent=5 // pred_check_branch
        %185 = sbr.rel (%p182) target = $region36
      $region35: #{tpu_custom_call.1} parent=5 // pred_region
        %s186 = ssub.s32 %s16, 1
        %s187 = sand.u32 %s29, 1
        %s188 = scalar_lea.sflag [#allocation4], %s187
        %s189 = sand.u32 %s29, 1
        %s190 = smul.addr %s189, 64
        %s191 = scalar_lea.vmem [#allocation3], %s190
        // Predicated region
        $region37: #{tpu_custom_call.1} parent=35 // pred_check
          %p192 = pneg %p42
        $region38: #{tpu_custom_call.1} parent=35 // pred_check_branch
          %194 = sbr.rel (%p192) target = $region40
        $region39: #{tpu_custom_call.1} parent=35 // pred_region
          %195 = dma.done %s188, 1024
        $region40: #{tpu_custom_call.1} parent=35 // pred_fallthru
          _
        %s196 = sand.u32 %s29, 1
        %s197 = scalar_lea.sflag [#allocation4], %s196
        %s198 = sand.u32 %s29, 1
        %s199 = smul.addr %s198, 64
        %s200 = scalar_lea.vmem [#allocation3], %s199
        %p201 = pneg %p42
        %p202 = pneg %p39
        %p203 = pneg %p63
        %p204 = pneg %p60
        %p205 = pneg %p84
        %p206 = pneg %p81
        %p207 = pneg %p105
        %p208 = pneg %p102
        %p209 = pneg %p131
        %p210 = pneg %p128
        %s211 = sand.u32 %s118, 1
        %s212 = scalar_lea.sflag [#allocation5], %s211
        %s213 = sand.u32 %s118, 1
        %s214 = smul.addr %s213, 8
        %s215 = scalar_lea.vmem [#allocation6], %s214
        %v217 = vld [vmem:[%s191] sm:$0xff]
        %v218 = vld [vmem:[%s191 + $0x10] sm:$0xff]
        %v219 = vld [vmem:[%s191 + $0x20] sm:$0xff]
        %v220 = vld [vmem:[%s191 + $0x30] sm:$0xff]
        %vm221 = vcmask 130048
        %v222 = vsel %vm221, %v217, 0.0
        %v223 = vrot.slane %v222, 4
        %v224 = vadd.f32 %v222, %v223
        %v225 = vrot.slane %v224, 2
        %v226 = vadd.f32 %v224, %v225
        %v227 = vrot.slane %v226, 1
        %v228 = vadd.f32 %v226, %v227
        %v229 = vsel %vm221, %v218, 0.0
        %v230 = vrot.slane %v229, 4
        %v231 = vadd.f32 %v229, %v230
        %v232 = vrot.slane %v231, 2
        %v233 = vadd.f32 %v231, %v232
        %v234 = vrot.slane %v233, 1
        %v235 = vadd.f32 %v233, %v234
        %v236 = vsel %vm221, %v219, 0.0
        %v237 = vrot.slane %v236, 4
        %v238 = vadd.f32 %v236, %v237
        %v239 = vrot.slane %v238, 2
        %v240 = vadd.f32 %v238, %v239
        %v241 = vrot.slane %v240, 1
        %v242 = vadd.f32 %v240, %v241
        %v243 = vsel %vm221, %v220, 0.0
        %v244 = vrot.slane %v243, 4
        %v245 = vadd.f32 %v243, %v244
        %v246 = vrot.slane %v245, 2
        %v247 = vadd.f32 %v245, %v246
        %v248 = vrot.slane %v247, 1
        %v249 = vadd.f32 %v247, %v248
        %v250 = vadd.f32 %v228, 0.0
        %v251 = vadd.f32 %v235, 0.0
        %v252 = vadd.f32 %v242, 0.0
        %v253 = vadd.f32 %v249, 0.0
        %s254 = scalar_lea.vmem %s191, 8 [#allocation3]
        %v255 = vld [vmem:[%s254] sm:$0xff]
        %v256 = vld [vmem:[%s254 + $0x10] sm:$0xff]
        %v257 = vld [vmem:[%s254 + $0x20] sm:$0xff]
        %v258 = vld [vmem:[%s254 + $0x30] sm:$0xff]
        %v259 = vsel %vm221, %v255, 0.0
        %v260 = vrot.slane %v259, 4
        %v261 = vadd.f32 %v259, %v260
        %v262 = vrot.slane %v261, 2
        %v263 = vadd.f32 %v261, %v262
        %v264 = vrot.slane %v263, 1
        %v265 = vadd.f32 %v263, %v264
        %v266 = vsel %vm221, %v256, 0.0
        %v267 = vrot.slane %v266, 4
        %v268 = vadd.f32 %v266, %v267
        %v269 = vrot.slane %v268, 2
        %v270 = vadd.f32 %v268, %v269
        %v271 = vrot.slane %v270, 1
        %v272 = vadd.f32 %v270, %v271
        %v273 = vsel %vm221, %v257, 0.0
        %v274 = vrot.slane %v273, 4
        %v275 = vadd.f32 %v273, %v274
        %v276 = vrot.slane %v275, 2
        %v277 = vadd.f32 %v275, %v276
        %v278 = vrot.slane %v277, 1
        %v279 = vadd.f32 %v277, %v278
        %v280 = vsel %vm221, %v258, 0.0
        %v281 = vrot.slane %v280, 4
        %v282 = vadd.f32 %v280, %v281
        %v283 = vrot.slane %v282, 2
        %v284 = vadd.f32 %v282, %v283
        %v285 = vrot.slane %v284, 1
        %v286 = vadd.f32 %v284, %v285
        %v287 = vadd.f32 %v250, %v265
        %v288 = vadd.f32 %v251, %v272
        %v289 = vadd.f32 %v252, %v279
        %v290 = vadd.f32 %v253, %v286
        %v291 = vmul.f32 %v287, 0.0625
        %v292 = vmul.f32 %v288, 0.0625
        %v293 = vmul.f32 %v289, 0.0625
        %v294 = vmul.f32 %v290, 0.0625
        %v295 = vpack.c.bf16 %v291, %v291
        %v296 = vpack.c.bf16 %v292, %v292
        %v297 = vpack.c.bf16 %v293, %v293
        %v298 = vpack.c.bf16 %v294, %v294
        %v303 = vunpack.c.l.b16 %v295
        %v304 = vunpack.c.l.b16 %v296
        %v305 = vunpack.c.l.b16 %v297
        %v306 = vunpack.c.l.b16 %v298
        %vm307 = vcmask 1041409
        %v308 = vsel %vm307, %v304, %v303
        %vm309 = vcmask 1042434
        %v310 = vsel %vm309, %v305, %v308
        %vm311 = vcmask 1043459
        %v312 = vsel %vm311, %v306, %v310
        %v313 = vpack.c.b16 %v312, %v312
        %314 = vrot.lane.b32.xlu0 %v313, 2
        %v315 = vpop.permute.xlu0 %314
        %vm316 = vcmask 15360
        %v319 = vsel %vm316, 0, %v315
        %vm320 = vcmask 146432
        %v321 = vsel %vm320, %v319, 0
        %vm323 = vcmask 123904
        %324 = vst.msk [vmem:[#allocation2] sm:$0x3] %vm323, %v321
        %v326 = vunpack.c.l.b16 %v321
        %v327 = vpack.c.b16 %v326, %v326
        %v328 = vrot.slane %v327, 6
        %329 = vrot.lane.b32.xlu0 %v328, 127
        %v330 = vpop.permute.xlu0 %329
        %vm332 = vcmask 125954
        %333 = vst.msk [vmem:[#allocation2] sm:$0xc] %vm332, %v330
        %334 = vrot.lane.b32.xlu0 %v327, 126
        %v335 = vpop.permute.xlu0 %334
        %337 = vst.msk [vmem:[#allocation2 + $0x4] sm:$0x3] %vm323, %v335
        %338 = vrot.lane.b32.xlu0 %v328, 125
        %v339 = vpop.permute.xlu0 %338
        %341 = vst.msk [vmem:[#allocation2 + $0x4] sm:$0xc] %vm332, %v339
        %342 = vrot.lane.b32.xlu0 %v327, 124
        %v343 = vpop.permute.xlu0 %342
        %345 = vst.msk [vmem:[#allocation2 + $0x8] sm:$0x3] %vm323, %v343
        %v346 = vld [vmem:[%s1] sm:$0xf]
        %v347 = vld [vmem:[#allocation2] sm:$0xf]
        %v348 = vld [vmem:[#allocation2 + $0x4] sm:$0xf]
        %v349 = vld [vmem:[#allocation2 + $0x8] sm:$0x3]
        %v353 = vunpack.c.l.b16 %v347
        %v354 = vunpack.c.l.b16 %v348
        %v355 = vunpack.c.l.b16 %v349
        %v356 = vpack.c.b16 %v354, %v353
        %v357 = vpack.c.b16 %v355, %v355
        %vm359 = vcmask 162816
        %v361 = vsel %vm359, %v346, 0
        %vm363 = vcmask 1041408
        %v365 = vsel %vm363, %v357, 0
        %367 = vmatprep.subr.bf16.mxu0 0
        %368 = vmatpush1.bf16.msra.mxu0 0
        %369 = vmatprep.subr.bf16.mxu0 0
        %370 = vmatpush1.bf16.msra.mxu0 0
        %371 = vmatprep.subr.bf16.mxu0 0
        %372 = vmatpush1.bf16.msra.mxu0 0
        %373 = vmatprep.subr.bf16.mxu0 0
        %374 = vmatpush1.bf16.msra.mxu0 0
        %375 = vmatprep.subr.bf16.mxu0 0
        %376 = vmatpush1.bf16.msra.mxu0 0
        %377 = vmatprep.subr.bf16.mxu0 0
        %378 = vmatpush1.bf16.msra.mxu0 0
        %379 = vmatprep.subr.bf16.mxu0 0
        %380 = vmatpush1.bf16.msra.mxu0 %v365
        %381 = vmatprep.subr.bf16.mxu0 0
        %382 = vmatpush1.bf16.msra.mxu0 %v356
        %383 = vmatprep.subr.bf16.mxu0 0
        %384 = vmatpush2.bf16.msra.mxu0 0
        %385 = vmatprep.subr.bf16.mxu0 0
        %386 = vmatpush2.bf16.msra.mxu0 0
        %387 = vmatprep.subr.bf16.mxu0 0
        %388 = vmatpush2.bf16.msra.mxu0 0
        %389 = vmatprep.subr.bf16.mxu0 0
        %390 = vmatpush2.bf16.msra.mxu0 0
        %391 = vmatprep.subr.bf16.mxu0 0
        %392 = vmatpush2.bf16.msra.mxu0 0
        %393 = vmatprep.subr.bf16.mxu0 0
        %394 = vmatpush2.bf16.msra.mxu0 0
        %395 = vmatprep.subr.bf16.mxu0 0
        %396 = vmatpush2.bf16.msra.mxu0 0
        %397 = vmatprep.subr.bf16.mxu0 0
        %398 = vmatpush2.bf16.msra.mxu0 0
        %399 = vmatprep.mubr.bf16.mxu0 0
        %400 = vmatmul.mubr.bf16.gmra.mxu0 %v361
        %v401 = vpop.f32.mrf.mxu0
        %v402 = vadd.f32 0.0, %v401
        %v403 = vpop.f32.mrf.mxu0
        %v404 = vpop.f32.mrf.mxu0
        %v405 = vpop.f32.mrf.mxu0
        %406 = vdwg.mxu0
        %v407 = vld [vmem:[%s2] sm:$0xff]
        %409 = vset.pattern.permute.xlu0 0
        %410 = vperm.xlu0 %409, %v407
        %v411 = vpop.permute.xlu0 %410
        %v413 = vmul.f32 %v402, %v411
        %v414 = vld [vmem:[%s3] sm:$0xff]
        %416 = vset.pattern.permute.xlu0 0
        %417 = vperm.xlu0 %416, %v414
        %v418 = vpop.permute.xlu0 %417
        %v420 = vadd.f32 %v413, %v418
        %v421 = vmax.f32 %v420, 0.0
        %422 = vst [vmem:[%s215] sm:$0xff] %v421
        %s423 = sand.u32 %s118, 1
        %s424 = scalar_lea.sflag [#allocation5], %s423
        %s425 = sand.u32 %s118, 1
        %s426 = smul.addr %s425, 8
        %s427 = scalar_lea.vmem [#allocation6], %s426
        // Predicated region
        $region41: #{tpu_custom_call.1} parent=35 // pred_check
          %p428 = pneg %p128
        $region42: #{tpu_custom_call.1} parent=35 // pred_check_branch
          %430 = sbr.rel (%p428) target = $region44
        $region43: #{tpu_custom_call.1} parent=35 // pred_region
          %s432 = ssub.s32 128, 128
          %433 = vsyncadd %s424, %s432
          %s434 = smul.addr %s21, 128
          %s435 = scalar_lea.hbm %s4, %s434
          %s437 = sshll.u32 %s427, 4
          %s438 = int_to_ptr.vmem [resolvable:$true] %s437
          %440 = dma.vmem_to_hbm [thread:$0]  %s438, 128, %s435, %s424
        $region44: #{tpu_custom_call.1} parent=35 // pred_fallthru
          _
      $region36: #{tpu_custom_call.1} parent=5 // pred_fallthru
        _
      %p441 = scmp.le.s32.totalorder 2, %s16
      // Predicated region
      $region45: #{tpu_custom_call.1} parent=5 // pred_check
        %p442 = pneg %p441
      $region46: #{tpu_custom_call.1} parent=5 // pred_check_branch
        %444 = sbr.rel (%p442) target = $region48
      $region47: #{tpu_custom_call.1} parent=5 // pred_region
        %s445 = ssub.s32 %s16, 2
        // Predicated region
        $region49: #{tpu_custom_call.1} parent=47 // pred_check
          %p446 = pneg %p134
        $region50: #{tpu_custom_call.1} parent=47 // pred_check_branch
          %448 = sbr.rel (%p446) target = $region52
        $region51: #{tpu_custom_call.1} parent=47 // pred_region
          %s449 = sand.u32 %s119, 1
          %s450 = scalar_lea.sflag [#allocation5], %s449
          %s451 = sand.u32 %s119, 1
          %s452 = smul.addr %s451, 8
          %s453 = scalar_lea.vmem [#allocation6], %s452
          %454 = dma.done %s450, 128
        $region52: #{tpu_custom_call.1} parent=47 // pred_fallthru
          _
      $region48: #{tpu_custom_call.1} parent=5 // pred_fallthru
        _
    $region6: #{tpu_custom_call.1} parent=1 // loop_footer
      %s20 = sadd.s32 1, %s16
    $region7: #{tpu_custom_call.1} parent=1 // loop_footer_branch
      %15 = sbr.rel target = $region3
    $region8: #{tpu_custom_call.1} parent=1 // loop_exit
      _
    %455 = vsyncpa [#allocation4], 1
    %s456 = scalar_lea.sflag [#allocation4], 1
    %457 = vsyncpa %s456, 1
    %458 = vsyncpa [#allocation5], 1
    %s459 = scalar_lea.sflag [#allocation5], 1
    %460 = vsyncpa %s459, 1

</llo_original>
